<compile_context>
chip_gen: v7x
topology: tpu7x:2x2x1
jax: 0.10.0
libtpu: 0.0.40
codegen_flags: <defaults>
</compile_context>

<pallas_src>
import functools

import jax
import jax.numpy as jnp
from jax import lax
from jax.experimental import pallas as pl
from jax.experimental.pallas import tpu as pltpu


def _nonlocal_kernel(x_ref, wphi_ref, wtheta_ref, wg_ref, wmask_ref, out_ref,
                     theta_scr, y_acc, *, c2, m, m_pad, tn):
    """Grid = (batch, column tiles of the padded viewed spatial axis)."""
    j = pl.program_id(1)
    last = pl.num_programs(1) - 1
    hw_pad = 2 * m_pad
    bf16 = jnp.bfloat16
    f32 = jnp.float32

    # ---- theta conv: the only resident conv output, computed once per batch.
    # Stacked halves along the sublane/contraction axis: rows [0:c2] come from
    # x columns [0, m_pad) (even viewed channels), rows [c2:2c2] from columns
    # [m_pad, 2*m_pad) (odd viewed channels).
    @pl.when(j == 0)
    def _():
        th0 = jnp.dot(wtheta_ref[...], x_ref[0, :, 0:m_pad],
                      preferred_element_type=f32)
        th1 = jnp.dot(wtheta_ref[...], x_ref[0, :, m_pad:hw_pad],
                      preferred_element_type=f32)
        theta_scr[...] = jnp.concatenate([th0, th1], axis=0).astype(bf16)

    # ---- per-tile phi / g convs (no resident phi/g scratch; each spatial
    # column is still only computed once across the whole grid).
    n0 = pl.multiple_of(j * tn, 128)
    n1 = pl.multiple_of(m_pad + j * tn, 128)
    x0 = x_ref[0, :, pl.ds(n0, tn)]                       # (c, tn) bf16
    x1 = x_ref[0, :, pl.ds(n1, tn)]

    phi_t = jnp.concatenate(
        [jnp.dot(wphi_ref[...], x0, preferred_element_type=f32),
         jnp.dot(wphi_ref[...], x1, preferred_element_type=f32)],
        axis=0).astype(bf16)                              # (2*c2, tn)
    g_t = jnp.concatenate(
        [jnp.dot(wg_ref[...], x0, preferred_element_type=f32),
         jnp.dot(wg_ref[...], x1, preferred_element_type=f32)],
        axis=0).astype(bf16)                              # (2*c2, tn)

    # ---- transposed score tile: a2[n, m'] == (x_theta @ x_phi)[m', n], so the
    # PyTorch Softmax(dim=1) becomes a plain lane-axis softmax, complete within
    # this tile.  Single stacked dot (contraction depth 2*c2).
    a2 = lax.dot_general(phi_t, theta_scr[...], (((0,), (0,)), ((), ())),
                         preferred_element_type=f32)      # (tn, m_pad)
    if m_pad > m:
        # Padded key rows (zero theta columns) must not enter the softmax.
        lane = lax.broadcasted_iota(jnp.int32, (tn, m_pad), 1)
        a2 = jnp.where(lane < m, a2, f32(-1e30))
    a2 = a2 - jnp.max(a2, axis=-1, keepdims=True)
    e = jnp.exp(a2)
    inv = pl.reciprocal(jnp.sum(e, axis=-1, keepdims=True), approx=True)
    p2 = (e * inv).astype(bf16)                           # (tn, m_pad)

    # ---- y accumulation: one (2*c2, tn) @ (tn, m_pad) dot per tile; the init
    # is folded into the first tile (no zero-fill pass).
    contrib = jnp.dot(g_t, p2, preferred_element_type=f32)   # (2*c2, m_pad)

    @pl.when(j == 0)
    def _():
        y_acc[...] = contrib

    @pl.when(j > 0)
    def _():
        y_acc[...] = y_acc[...] + contrib

    # ---- mask conv (1x1) + residual at the last tile, lane-aligned stores.
    @pl.when(j == last)
    def _():
        wm = wmask_ref[...]
        y_even = y_acc[0:c2, :].astype(bf16)              # viewed channels 2i
        y_odd = y_acc[c2:2 * c2, :].astype(bf16)          # viewed channels 2i+1
        out_ref[0, :, 0:m_pad] = (
            jnp.dot(wm, y_even, preferred_element_type=f32)
            + x_ref[0, :, 0:m_pad].astype(f32))
        out_ref[0, :, m_pad:hw_pad] = (
            jnp.dot(wm, y_odd, preferred_element_type=f32)
            + x_ref[0, :, m_pad:hw_pad].astype(f32))


def _vmem_capacity_bytes():
    try:
        cap = int(pltpu.get_tpu_info().vmem_capacity_bytes)
        if cap > 0:
            return cap
    except Exception:
        pass
    return 64 << 20          # conservative (v7x-sized) fallback


def _plan_tiles(c, c2, m_pad, vmem_cap):
    """Generation-aware column-tile width + scoped-VMEM limit."""
    hw_pad = 2 * m_pad
    io = 2 * c * hw_pad * 2 + 2 * c * hw_pad * 4     # dbl-buffered x (bf16) + out (f32)
    wts = 2 * 2 * (3 * c2 * c + c * c2)              # dbl-buffered bf16 weights
    scr = 2 * c2 * m_pad * (2 + 4)                   # theta (bf16) + y_acc (f32)
    budget = int(0.85 * vmem_cap)
    tn = 128
    for t in (512, 256, 128):                        # 256-multiples first (MXU width)
        if m_pad % t:
            continue
        tmp = 3 * t * m_pad * 4 + 6 * (2 * c2) * t * 4   # a2/e/p2 + phi/g temporaries
        if io + wts + scr + tmp <= budget:
            tn = t
            break
    tmp = 3 * tn * m_pad * 4 + 6 * (2 * c2) * tn * 4
    est = io + wts + scr + tmp
    limit = int(min(int(0.9 * vmem_cap), max(32 << 20, int(1.3 * est) + (8 << 20))))
    return tn, limit


def non_local_module(x, w_phi, w_theta, w_g, w_mask):
    """x: (b, c, h, w) f32; w_phi/w_theta/w_g: (c//2, c); w_mask: (c, c//2)."""
    b, c, h, w = x.shape
    hw = h * w
    assert c % 2 == 0 and hw % 2 == 0, "channel count and h*w must be even"
    c2 = c // 2
    m = hw // 2

    # Pad the viewed spatial axis to a lane-aligned multiple of 128: unmasked
    # vld/vst on every tile and live pl.multiple_of hints.  Padded key rows are
    # masked in-kernel; padded query/value columns contribute exactly zero.
    m_pad = ((m + 127) // 128) * 128
    hw_pad = 2 * m_pad

    xh = x.reshape(b, c, 2, m)
    if m_pad != m:
        xh = jnp.pad(xh, ((0, 0), (0, 0), (0, 0), (0, m_pad - m)))
    xb = xh.reshape(b, c, hw_pad).astype(jnp.bfloat16)   # bf16 x: halves HBM/VMEM

    wphi = w_phi.astype(jnp.bfloat16)
    wtheta = w_theta.astype(jnp.bfloat16)
    wg = w_g.astype(jnp.bfloat16)
    wm = w_mask.astype(jnp.bfloat16)

    vmem_cap = _vmem_capacity_bytes()
    tn, vmem_limit = _plan_tiles(c, c2, m_pad, vmem_cap)
    n_tiles = m_pad // tn

    kernel = functools.partial(_nonlocal_kernel, c2=c2, m=m, m_pad=m_pad, tn=tn)

    out = pl.pallas_call(
        kernel,
        grid=(b, n_tiles),
        in_specs=[
            pl.BlockSpec((1, c, hw_pad), lambda i, j: (i, 0, 0)),   # x (bf16)
            pl.BlockSpec((c2, c), lambda i, j: (0, 0)),             # w_phi
            pl.BlockSpec((c2, c), lambda i, j: (0, 0)),             # w_theta
            pl.BlockSpec((c2, c), lambda i, j: (0, 0)),             # w_g
            pl.BlockSpec((c, c2), lambda i, j: (0, 0)),             # w_mask
        ],
        out_specs=pl.BlockSpec((1, c, hw_pad), lambda i, j: (i, 0, 0)),
        out_shape=jax.ShapeDtypeStruct((b, c, hw_pad), jnp.float32),
        scratch_shapes=[
            pltpu.VMEM((2 * c2, m_pad), jnp.bfloat16),   # theta conv (stacked halves)
            pltpu.VMEM((2 * c2, m_pad), jnp.float32),    # y accumulator (stacked)
        ],
        compiler_params=pltpu.CompilerParams(
            # Batch is the megacore-parallel axis (b >= 2 keeps both v7x cores
            # busy); the column-tile axis carries the accumulator so it stays
            # sequential.
            dimension_semantics=("parallel", "arbitrary"),
            vmem_limit_bytes=vmem_limit,
        ),
    )(xb, wphi, wtheta, wg, wm)

    out = out.reshape(b, c, 2, m_pad)[..., :m].reshape(b, c, h, w)
    return out


def _reference(x, w_phi, w_theta, w_g, w_mask):
    # Pure-JAX replica of the PyTorch forward (including the .view quirk),
    # mirroring the kernel's precision choices: bf16 MXU operands / bf16 x,
    # f32 accumulation, f32 softmax.
    b, c, h, w = x.shape
    c2 = c // 2
    hw = h * w
    m = hw // 2
    xb = x.reshape(b, c, hw).astype(jnp.bfloat16)
    conv = lambda W: jnp.einsum('oc,bcs->bos', W.astype(jnp.bfloat16), xb,
                                preferred_element_type=jnp.float32)
    x_phi = conv(w_phi).reshape(b, c, m)                      # .view quirk
    x_theta = conv(w_theta).reshape(b, c, m).transpose(0, 2, 1)
    x_g = conv(w_g).reshape(b, c, m).transpose(0, 2, 1)
    att = jnp.einsum('bmc,bcn->bmn', x_theta.astype(jnp.bfloat16),
                     x_phi.astype(jnp.bfloat16),
                     preferred_element_type=jnp.float32)
    att = jax.nn.softmax(att, axis=1)
    y = jnp.einsum('bmn,bnc->bmc', att.astype(jnp.bfloat16),
                   x_g.astype(jnp.bfloat16),
                   preferred_element_type=jnp.float32)
    y = y.transpose(0, 2, 1).reshape(b, c2, hw)
    mask = jnp.einsum('oc,bcs->bos', w_mask.astype(jnp.bfloat16),
                      y.astype(jnp.bfloat16),
                      preferred_element_type=jnp.float32)
    return (mask + xb.astype(jnp.float32)).reshape(b, c, h, w)


def _run_case(key, b, c, h, w):
    c2 = c // 2
    k_x, k_phi, k_theta, k_g, k_mask = jax.random.split(key, 5)
    x = jax.random.normal(k_x, (b, c, h, w), dtype=jnp.float32)
    # Conv2d(k=1, bias=False) weights, squeezed to (out_ch, in_ch).
    w_phi = jax.random.normal(k_phi, (c2, c), dtype=jnp.float32) / (c ** 0.5)
    w_theta = jax.random.normal(k_theta, (c2, c), dtype=jnp.float32) / (c ** 0.5)
    w_g = jax.random.normal(k_g, (c2, c), dtype=jnp.float32) / (c ** 0.5)
    w_mask = jax.random.normal(k_mask, (c, c2), dtype=jnp.float32) / (c2 ** 0.5)

    out = non_local_module(x, w_phi, w_theta, w_g, w_mask)
    out = jax.block_until_ready(out)
    ref = _reference(x, w_phi, w_theta, w_g, w_mask)
    assert out.shape == (b, c, h, w)
    max_err = jnp.max(jnp.abs(out - ref))
    assert jnp.allclose(out, ref, atol=2e-2, rtol=2e-2), (
        f"mismatch vs reference at shape {(b, c, h, w)} (max abs err {max_err})")


if __name__ == "__main__":
    key = jax.random.PRNGKey(0)
    k1, k2 = jax.random.split(key)
    # Lane-aligned case (h*w//2 == 128): single column tile per batch.
    _run_case(k1, b=2, c=4, h=16, w=16)
    # Unaligned case (h*w//2 == 288 -> padded to 384): 3 column tiles, exercises
    # the multi-tile accumulation and the masked-softmax padding path.
    _run_case(k2, b=1, c=8, h=24, w=24)
    print("KERNEL_OK")
</pallas_src>

<mosaic_0001>
module attributes {stable_mosaic.version = 11 : i64} {
  func.func @_nonlocal_kernel(%arg0: i32, %arg1: i32, %arg2: memref<1x4x256xbf16, #tpu.memory_space<vmem>>, %arg3: memref<2x4xbf16, #tpu.memory_space<vmem>>, %arg4: memref<2x4xbf16, #tpu.memory_space<vmem>>, %arg5: memref<2x4xbf16, #tpu.memory_space<vmem>>, %arg6: memref<4x2xbf16, #tpu.memory_space<vmem>>, %arg7: memref<1x4x256xf32, #tpu.memory_space<vmem>>, %arg8: memref<4x128xbf16, #tpu.memory_space<vmem>>, %arg9: memref<4x128xf32, #tpu.memory_space<vmem>>) attributes {dimension_semantics = [#tpu.dimension_semantics<parallel>, #tpu.dimension_semantics<arbitrary>], iteration_bounds = array<i64: 2, 1>, scalar_prefetch = 0 : i64, scratch_operands = 2 : i64, tpu.core_type = #tpu.core_type<tc>, window_params = [{transform_indices = @transform_0, window_bounds = array<i64: 1, 4, 256>}, {pipeline_mode = #tpu.pipeline_mode<synchronous>, transform_indices = @transform_1, window_bounds = array<i64: 2, 4>}, {pipeline_mode = #tpu.pipeline_mode<synchronous>, transform_indices = @transform_2, window_bounds = array<i64: 2, 4>}, {pipeline_mode = #tpu.pipeline_mode<synchronous>, transform_indices = @transform_3, window_bounds = array<i64: 2, 4>}, {pipeline_mode = #tpu.pipeline_mode<synchronous>, transform_indices = @transform_4, window_bounds = array<i64: 4, 2>}, {transform_indices = @transform_5, window_bounds = array<i64: 1, 4, 256>}]} {
    %c0_i32 = arith.constant 0 : i32
    %0 = arith.cmpi eq, %arg1, %c0_i32 : i32
    %1 = arith.extui %0 : i1 to i32
    %c0_i32_0 = arith.constant 0 : i32
    %2 = arith.cmpi ne, %1, %c0_i32_0 : i32
    scf.if %2 {
      %c0_29 = arith.constant 0 : index
      %c0_30 = arith.constant 0 : index
      %49 = vector.load %arg4[%c0_29, %c0_30] : memref<2x4xbf16, #tpu.memory_space<vmem>>, vector<2x4xbf16>
      %c0_31 = arith.constant 0 : index
      %c0_32 = arith.constant 0 : index
      %c0_33 = arith.constant 0 : index
      %50 = vector.load %arg2[%c0_31, %c0_32, %c0_33] : memref<1x4x256xbf16, #tpu.memory_space<vmem>>, vector<1x4x128xbf16>
      %51 = vector.shape_cast %50 : vector<1x4x128xbf16> to vector<4x128xbf16>
      %cst_34 = arith.constant dense<0.000000e+00> : vector<2x128xf32>
      %52 = tpu.matmul %49, %51, %cst_34 {dimension_numbers = #tpu.dot_dimension_numbers<[1], [0], [0], [1], [0, 0, 1, 1], [], []>} : vector<2x4xbf16>, vector<4x128xbf16>, vector<2x128xf32> -> vector<2x128xf32>
      %c0_35 = arith.constant 0 : index
      %c0_36 = arith.constant 0 : index
      %53 = vector.load %arg4[%c0_35, %c0_36] : memref<2x4xbf16, #tpu.memory_space<vmem>>, vector<2x4xbf16>
      %c0_37 = arith.constant 0 : index
      %c0_38 = arith.constant 0 : index
      %c128 = arith.constant 128 : index
      %54 = vector.load %arg2[%c0_37, %c0_38, %c128] : memref<1x4x256xbf16, #tpu.memory_space<vmem>>, vector<1x4x128xbf16>
      %55 = vector.shape_cast %54 : vector<1x4x128xbf16> to vector<4x128xbf16>
      %cst_39 = arith.constant dense<0.000000e+00> : vector<2x128xf32>
      %56 = tpu.matmul %53, %55, %cst_39 {dimension_numbers = #tpu.dot_dimension_numbers<[1], [0], [0], [1], [0, 0, 1, 1], [], []>} : vector<2x4xbf16>, vector<4x128xbf16>, vector<2x128xf32> -> vector<2x128xf32>
      %57 = tpu.concatenate %52, %56 in 0 : vector<2x128xf32>, vector<2x128xf32> -> vector<4x128xf32>
      %58 = arith.truncf %57 : vector<4x128xf32> to vector<4x128xbf16>
      %c0_40 = arith.constant 0 : index
      %c0_41 = arith.constant 0 : index
      %59 = vector.load %arg8[%c0_40, %c0_41] : memref<4x128xbf16, #tpu.memory_space<vmem>>, vector<4x128xbf16>
      tpu.vector_store %arg8[%c0_40, %c0_41], %58 {strides = array<i32>} : memref<4x128xbf16, #tpu.memory_space<vmem>>, vector<4x128xbf16>,
    } else {
    }
    %c128_i32 = arith.constant 128 : i32
    %3 = arith.muli %arg1, %c128_i32 : i32
    %4 = tpu.assume_multiple %3, 128 : i32
    %c128_i32_1 = arith.constant 128 : i32
    %5 = arith.muli %arg1, %c128_i32_1 : i32
    %c128_i32_2 = arith.constant 128 : i32
    %6 = arith.addi %c128_i32_2, %5 : i32
    %7 = tpu.assume_multiple %6, 128 : i32
    %c0 = arith.constant 0 : index
    %c0_3 = arith.constant 0 : index
    %8 = arith.index_cast %4 : i32 to index
    %9 = vector.load %arg2[%c0, %c0_3, %8] : memref<1x4x256xbf16, #tpu.memory_space<vmem>>, vector<1x4x128xbf16>
    %10 = vector.shape_cast %9 : vector<1x4x128xbf16> to vector<4x128xbf16>
    %c0_4 = arith.constant 0 : index
    %c0_5 = arith.constant 0 : index
    %11 = arith.index_cast %7 : i32 to index
    %12 = vector.load %arg2[%c0_4, %c0_5, %11] : memref<1x4x256xbf16, #tpu.memory_space<vmem>>, vector<1x4x128xbf16>
    %13 = vector.shape_cast %12 : vector<1x4x128xbf16> to vector<4x128xbf16>
    %c0_6 = arith.constant 0 : index
    %c0_7 = arith.constant 0 : index
    %14 = vector.load %arg3[%c0_6, %c0_7] : memref<2x4xbf16, #tpu.memory_space<vmem>>, vector<2x4xbf16>
    %cst = arith.constant dense<0.000000e+00> : vector<2x128xf32>
    %15 = tpu.matmul %14, %10, %cst {dimension_numbers = #tpu.dot_dimension_numbers<[1], [0], [0], [1], [0, 0, 1, 1], [], []>} : vector<2x4xbf16>, vector<4x128xbf16>, vector<2x128xf32> -> vector<2x128xf32>
    %c0_8 = arith.constant 0 : index
    %c0_9 = arith.constant 0 : index
    %16 = vector.load %arg3[%c0_8, %c0_9] : memref<2x4xbf16, #tpu.memory_space<vmem>>, vector<2x4xbf16>
    %cst_10 = arith.constant dense<0.000000e+00> : vector<2x128xf32>
    %17 = tpu.matmul %16, %13, %cst_10 {dimension_numbers = #tpu.dot_dimension_numbers<[1], [0], [0], [1], [0, 0, 1, 1], [], []>} : vector<2x4xbf16>, vector<4x128xbf16>, vector<2x128xf32> -> vector<2x128xf32>
    %18 = tpu.concatenate %15, %17 in 0 : vector<2x128xf32>, vector<2x128xf32> -> vector<4x128xf32>
    %19 = arith.truncf %18 : vector<4x128xf32> to vector<4x128xbf16>
    %c0_11 = arith.constant 0 : index
    %c0_12 = arith.constant 0 : index
    %20 = vector.load %arg5[%c0_11, %c0_12] : memref<2x4xbf16, #tpu.memory_space<vmem>>, vector<2x4xbf16>
    %cst_13 = arith.constant dense<0.000000e+00> : vector<2x128xf32>
    %21 = tpu.matmul %20, %10, %cst_13 {dimension_numbers = #tpu.dot_dimension_numbers<[1], [0], [0], [1], [0, 0, 1, 1], [], []>} : vector<2x4xbf16>, vector<4x128xbf16>, vector<2x128xf32> -> vector<2x128xf32>
    %c0_14 = arith.constant 0 : index
    %c0_15 = arith.constant 0 : index
    %22 = vector.load %arg5[%c0_14, %c0_15] : memref<2x4xbf16, #tpu.memory_space<vmem>>, vector<2x4xbf16>
    %cst_16 = arith.constant dense<0.000000e+00> : vector<2x128xf32>
    %23 = tpu.matmul %22, %13, %cst_16 {dimension_numbers = #tpu.dot_dimension_numbers<[1], [0], [0], [1], [0, 0, 1, 1], [], []>} : vector<2x4xbf16>, vector<4x128xbf16>, vector<2x128xf32> -> vector<2x128xf32>
    %24 = tpu.concatenate %21, %23 in 0 : vector<2x128xf32>, vector<2x128xf32> -> vector<4x128xf32>
    %25 = arith.truncf %24 : vector<4x128xf32> to vector<4x128xbf16>
    %c0_17 = arith.constant 0 : index
    %c0_18 = arith.constant 0 : index
    %26 = vector.load %arg8[%c0_17, %c0_18] : memref<4x128xbf16, #tpu.memory_space<vmem>>, vector<4x128xbf16>
    %cst_19 = arith.constant dense<0.000000e+00> : vector<128x128xf32>
    %27 = tpu.matmul %19, %26, %cst_19 {dimension_numbers = #tpu.dot_dimension_numbers<[0], [0], [1], [1], [0, 1, 1, 1], [], []>} : vector<4x128xbf16>, vector<4x128xbf16>, vector<128x128xf32> -> vector<128x128xf32>
    %cst_20 = arith.constant dense<0xFF800000> : vector<128xf32>
    %28 = vector.multi_reduction <maximumf>, %27, %cst_20 [1] : vector<128x128xf32> to vector<128xf32>
    %29 = vector.shape_cast %28 : vector<128xf32> to vector<128x1xf32>
    %30 = vector.broadcast %29 : vector<128x1xf32> to vector<128x128xf32>
    %31 = arith.subf %27, %30 : vector<128x128xf32>
    %32 = math.exp %31 : vector<128x128xf32>
    %cst_21 = arith.constant dense<0.000000e+00> : vector<128xf32>
    %33 = vector.multi_reduction <add>, %32, %cst_21 [1] : vector<128x128xf32> to vector<128xf32>
    %34 = vector.shape_cast %33 : vector<128xf32> to vector<128x1xf32>
    %35 = tpu.reciprocal %34 {approx = true} : vector<128x1xf32> -> vector<128x1xf32>
    %36 = vector.broadcast %35 : vector<128x1xf32> to vector<128x128xf32>
    %37 = arith.mulf %32, %36 : vector<128x128xf32>
    %38 = arith.truncf %37 : vector<128x128xf32> to vector<128x128xbf16>
    %cst_22 = arith.constant dense<0.000000e+00> : vector<4x128xf32>
    %39 = tpu.matmul %25, %38, %cst_22 {dimension_numbers = #tpu.dot_dimension_numbers<[1], [0], [0], [1], [0, 0, 1, 1], [], []>} : vector<4x128xbf16>, vector<128x128xbf16>, vector<4x128xf32> -> vector<4x128xf32>
    %c0_i32_23 = arith.constant 0 : i32
    %40 = arith.cmpi eq, %arg1, %c0_i32_23 : i32
    %41 = arith.extui %40 : i1 to i32
    %c0_i32_24 = arith.constant 0 : i32
    %42 = arith.cmpi ne, %41, %c0_i32_24 : i32
    scf.if %42 {
      %c0_29 = arith.constant 0 : index
      %c0_30 = arith.constant 0 : index
      %49 = vector.load %arg9[%c0_29, %c0_30] : memref<4x128xf32, #tpu.memory_space<vmem>>, vector<4x128xf32>
      tpu.vector_store %arg9[%c0_29, %c0_30], %39 {strides = array<i32>} : memref<4x128xf32, #tpu.memory_space<vmem>>, vector<4x128xf32>,
    } else {
    }
    %c0_i32_25 = arith.constant 0 : i32
    %43 = arith.cmpi sgt, %arg1, %c0_i32_25 : i32
    %44 = arith.extui %43 : i1 to i32
    %c0_i32_26 = arith.constant 0 : i32
    %45 = arith.cmpi ne, %44, %c0_i32_26 : i32
    scf.if %45 {
      %c0_29 = arith.constant 0 : index
      %c0_30 = arith.constant 0 : index
      %49 = vector.load %arg9[%c0_29, %c0_30] : memref<4x128xf32, #tpu.memory_space<vmem>>, vector<4x128xf32>
      %50 = arith.addf %49, %39 : vector<4x128xf32>
      %c0_31 = arith.constant 0 : index
      %c0_32 = arith.constant 0 : index
      %51 = vector.load %arg9[%c0_31, %c0_32] : memref<4x128xf32, #tpu.memory_space<vmem>>, vector<4x128xf32>
      tpu.vector_store %arg9[%c0_31, %c0_32], %50 {strides = array<i32>} : memref<4x128xf32, #tpu.memory_space<vmem>>, vector<4x128xf32>,
    } else {
    }
    %c0_i32_27 = arith.constant 0 : i32
    %46 = arith.cmpi eq, %arg1, %c0_i32_27 : i32
    %47 = arith.extui %46 : i1 to i32
    %c0_i32_28 = arith.constant 0 : i32
    %48 = arith.cmpi ne, %47, %c0_i32_28 : i32
    scf.if %48 {
      %c0_29 = arith.constant 0 : index
      %c0_30 = arith.constant 0 : index
      %49 = vector.load %arg6[%c0_29, %c0_30] : memref<4x2xbf16, #tpu.memory_space<vmem>>, vector<4x2xbf16>
      %c0_31 = arith.constant 0 : index
      %c0_32 = arith.constant 0 : index
      %50 = vector.load %arg9[%c0_31, %c0_32] : memref<4x128xf32, #tpu.memory_space<vmem>>, vector<2x128xf32>
      %51 = arith.truncf %50 : vector<2x128xf32> to vector<2x128xbf16>
      %c2 = arith.constant 2 : index
      %c0_33 = arith.constant 0 : index
      %52 = vector.load %arg9[%c2, %c0_33] : memref<4x128xf32, #tpu.memory_space<vmem>>, vector<2x128xf32>
      %53 = arith.truncf %52 : vector<2x128xf32> to vector<2x128xbf16>
      %cst_34 = arith.constant dense<0.000000e+00> : vector<4x128xf32>
      %54 = tpu.matmul %49, %51, %cst_34 {dimension_numbers = #tpu.dot_dimension_numbers<[1], [0], [0], [1], [0, 0, 1, 1], [], []>} : vector<4x2xbf16>, vector<2x128xbf16>, vector<4x128xf32> -> vector<4x128xf32>
      %c0_35 = arith.constant 0 : index
      %c0_36 = arith.constant 0 : index
      %c0_37 = arith.constant 0 : index
      %55 = vector.load %arg2[%c0_35, %c0_36, %c0_37] : memref<1x4x256xbf16, #tpu.memory_space<vmem>>, vector<1x4x128xbf16>
      %56 = vector.shape_cast %55 : vector<1x4x128xbf16> to vector<4x128xbf16>
      %57 = arith.extf %56 : vector<4x128xbf16> to vector<4x128xf32>
      %58 = arith.addf %54, %57 : vector<4x128xf32>
      %c0_38 = arith.constant 0 : index
      %c0_39 = arith.constant 0 : index
      %c0_40 = arith.constant 0 : index
      %59 = vector.load %arg7[%c0_38, %c0_39, %c0_40] : memref<1x4x256xf32, #tpu.memory_space<vmem>>, vector<1x4x128xf32>
      %60 = vector.shape_cast %59 : vector<1x4x128xf32> to vector<4x128xf32>
      %61 = vector.shape_cast %58 : vector<4x128xf32> to vector<1x4x128xf32>
      tpu.vector_store %arg7[%c0_38, %c0_39, %c0_40], %61 {strides = array<i32>} : memref<1x4x256xf32, #tpu.memory_space<vmem>>, vector<1x4x128xf32>,
      %cst_41 = arith.constant dense<0.000000e+00> : vector<4x128xf32>
      %62 = tpu.matmul %49, %53, %cst_41 {dimension_numbers = #tpu.dot_dimension_numbers<[1], [0], [0], [1], [0, 0, 1, 1], [], []>} : vector<4x2xbf16>, vector<2x128xbf16>, vector<4x128xf32> -> vector<4x128xf32>
      %c0_42 = arith.constant 0 : index
      %c0_43 = arith.constant 0 : index
      %c128 = arith.constant 128 : index
      %63 = vector.load %arg2[%c0_42, %c0_43, %c128] : memref<1x4x256xbf16, #tpu.memory_space<vmem>>, vector<1x4x128xbf16>
      %64 = vector.shape_cast %63 : vector<1x4x128xbf16> to vector<4x128xbf16>
      %65 = arith.extf %64 : vector<4x128xbf16> to vector<4x128xf32>
      %66 = arith.addf %62, %65 : vector<4x128xf32>
      %c0_44 = arith.constant 0 : index
      %c0_45 = arith.constant 0 : index
      %c128_46 = arith.constant 128 : index
      %67 = vector.load %arg7[%c0_44, %c0_45, %c128_46] : memref<1x4x256xf32, #tpu.memory_space<vmem>>, vector<1x4x128xf32>
      %68 = vector.shape_cast %67 : vector<1x4x128xf32> to vector<4x128xf32>
      %69 = vector.shape_cast %66 : vector<4x128xf32> to vector<1x4x128xf32>
      tpu.vector_store %arg7[%c0_44, %c0_45, %c128_46], %69 {strides = array<i32>} : memref<1x4x256xf32, #tpu.memory_space<vmem>>, vector<1x4x128xf32>,
    } else {
    }
    return
  }
  func.func @transform_0(%arg0: i32, %arg1: i32) -> (i32, i32, i32) {
    %c0_i32 = arith.constant 0 : i32
    %c0_i32_0 = arith.constant 0 : i32
    %c0_i32_1 = arith.constant 0 : i32
    return %arg0, %c0_i32, %c0_i32_0 : i32, i32, i32
  }
  func.func @transform_1(%arg0: i32, %arg1: i32) -> (i32, i32) {
    %c0_i32 = arith.constant 0 : i32
    %c0_i32_0 = arith.constant 0 : i32
    %c0_i32_1 = arith.constant 0 : i32
    return %c0_i32, %c0_i32_0 : i32, i32
  }
  func.func @transform_2(%arg0: i32, %arg1: i32) -> (i32, i32) {
    %c0_i32 = arith.constant 0 : i32
    %c0_i32_0 = arith.constant 0 : i32
    %c0_i32_1 = arith.constant 0 : i32
    return %c0_i32, %c0_i32_0 : i32, i32
  }
  func.func @transform_3(%arg0: i32, %arg1: i32) -> (i32, i32) {
    %c0_i32 = arith.constant 0 : i32
    %c0_i32_0 = arith.constant 0 : i32
    %c0_i32_1 = arith.constant 0 : i32
    return %c0_i32, %c0_i32_0 : i32, i32
  }
  func.func @transform_4(%arg0: i32, %arg1: i32) -> (i32, i32) {
    %c0_i32 = arith.constant 0 : i32
    %c0_i32_0 = arith.constant 0 : i32
    %c0_i32_1 = arith.constant 0 : i32
    return %c0_i32, %c0_i32_0 : i32, i32
  }
  func.func @transform_5(%arg0: i32, %arg1: i32) -> (i32, i32, i32) {
    %c0_i32 = arith.constant 0 : i32
    %c0_i32_0 = arith.constant 0 : i32
    %c0_i32_1 = arith.constant 0 : i32
    return %arg0, %c0_i32, %c0_i32_0 : i32, i32, i32
  }
}

</mosaic_0001>

<llo_original>
// kernel: tpu_custom_call.1
$region0: #{tpu_custom_call.1}
  #allocation0 [shape = 'u32[]', space=smem, size = 0x4, offset = 0x4, fixed_abs, tag = 'smem constant byte address 0x4 - core index']
  #allocation1 [shape = 'u32[144,128]{1,0:T(1,128)}', space=vmem, size = 0x12000, scoped, tag = 'internal scratch']
  #allocation2 [shape = 'bf16[4,128]{1,0:T(4,128)(2,1)}', space=vmem, size = 0x400, scoped, tag = 'scratch operand']
  #allocation3 [shape = 'f32[4,128]{1,0:T(4,128)}', space=vmem, size = 0x800, scoped, tag = 'scratch operand']
  %s0 = inlined_call_operand.hbm [shape: bf16[2,4,256], index: 0, kind: input, shape index: {}]
  %s1 = inlined_call_operand.vmem [shape: bf16[2,4], index: 1, kind: input, shape index: {}]
  %s2 = inlined_call_operand.vmem [shape: bf16[2,4], index: 2, kind: input, shape index: {}]
  %s3 = inlined_call_operand.vmem [shape: bf16[2,4], index: 3, kind: input, shape index: {}]
  %s4 = inlined_call_operand.vmem [shape: bf16[4,2], index: 4, kind: input, shape index: {}]
  %s5 = inlined_call_operand.hbm [shape: f32[2,4,256], index: 5, kind: output, shape index: {}]
  %s6 = sld [smem:[#allocation0]]
  $region73: #{tpu_custom_call.1} parent=0
    _
  %s8 = ssub.s32 1, %s6
  %s9 = scalar_select 0, %s8, %s6
  $region1: #{tpu_custom_call.1} parent=0
    #allocation4 [shape = 'u8[4096]{0}', space=vmem, size = 0x1000, scoped, tag = 'input window, operand 0']
    #allocation5 [shape = 's32[2]{0}', space=sflag, size = 0x8, scoped, tag = 'scoped memory for tpu_custom_call.1']
    #allocation6 [shape = 's32[2]{0}', space=sflag, size = 0x8, scoped, tag = 'scoped memory for tpu_custom_call.1']
    #allocation7 [shape = 'u8[8192]{0}', space=vmem, size = 0x2000, scoped, tag = 'output window, operand 0']
    %10 = vsyncpa [#allocation5], 0
    %s11 = scalar_lea.sflag [#allocation5], 1
    %12 = vsyncpa %s11, 0
    %13 = vsyncpa [#allocation6], 0
    %s14 = scalar_lea.sflag [#allocation6], 1
    %15 = vsyncpa %s14, 0
    loop: start=0, step=1, limit=4
    $region2: #{tpu_custom_call.1} parent=1 // loop_pre_header
      _
    $region3: #{tpu_custom_call.1} parent=1 // loop_header
      %s17 = sphi 0, %s21
      %p18 = scmp.ge.s32.totalorder %s17, 4
      %s24 = sphi 0, %s36
      %s25 = sphi 0, %s32
      %s26 = sphi 0, %s24
      %s27 = sphi 0, %s25
      %s28 = sphi 0, %s26
      %s29 = sphi 0, %s27
      %s39 = sphi 0, %s41
      %s42 = sphi 0, %s39
      %s43 = sphi 0, %s42
      %s59 = sphi 0, %s43
      %s63 = sphi 0, %s63
      %s65 = sphi 0, %s63
      %s66 = sphi 0, %s65
      %s80 = sphi 0, %s66
      %s84 = sphi 0, %s84
      %s86 = sphi 0, %s84
      %s87 = sphi 0, %s86
      %s101 = sphi 0, %s87
      %s105 = sphi 0, %s105
      %s107 = sphi 0, %s105
      %s108 = sphi 0, %s107
      %s122 = sphi 0, %s108
      %s126 = sphi 0, %s126
      %s128 = sphi 0, %s126
      %s129 = sphi 0, %s128
      %s143 = sphi 0, %s129
      %s149 = sphi 0, %s151
      %s152 = sphi 0, %s149
      %s153 = sphi 0, %s152
      %s169 = sphi 0, %s153
    $region4: #{tpu_custom_call.1} parent=1 // loop_header_branch
      %20 = sbr.rel (%p18) target = $region8
    $region5: #{tpu_custom_call.1} parent=1 // loop_body
      %s22 = ssub.s32 %s17, 1
      %s23 = ssub.s32 %s17, 2
      %s30 = sadd.s32 1, %s25
      %p31 = scmp.ge.s32.totalorder %s30, 1
      %s32 = scalar_select %p31, 0, %s30
      %s33 = sadd.s32 1, %s24
      %s34 = scalar_select %p31, %s33, %s24
      %p35 = scmp.ge.s32.totalorder %s34, 2
      %s36 = scalar_select %p35, 0, %s34
      %s37 = ssub.s32 %s24, %s36
      %p38 = scmp.eq.s32.totalorder %s37, 0
      %s40 = sadd.s32 %s39, 1
      %s41 = scalar_select %p38, %s39, %s40
      %p44 = pneg %p38
      %p45 = scmp.eq.s32.totalorder %s17, 1
      %p46 = por %p44, %p45
      %p47 = scmp.ne.s32.totalorder %s39, %s42
      %p48 = scmp.eq.s32.totalorder %s17, 0
      %p49 = por %p47, %p48
      %p50 = scmp.ne.s32.totalorder %s39, %s42
      %p51 = scmp.eq.s32.totalorder %s22, 1
      %p52 = por %p50, %p51
      %p53 = scmp.ne.s32.totalorder %s42, %s43
      %p54 = scmp.eq.s32.totalorder %s22, 0
      %p55 = por %p53, %p54
      %p56 = scmp.ne.s32.totalorder %s42, %s43
      %p57 = scmp.eq.s32.totalorder %s23, 1
      %p58 = por %p56, %p57
      %p60 = scmp.ne.s32.totalorder %s43, %s59
      %p61 = scmp.eq.s32.totalorder %s23, 0
      %p62 = por %p60, %p61
      %s64 = sadd.s32 %s63, 1
      %p67 = scmp.eq.s32.totalorder %s17, 1
      %p68 = scmp.ne.s32.totalorder %s63, %s65
      %p69 = scmp.eq.s32.totalorder %s17, 0
      %p70 = por %p68, %p69
      %p71 = scmp.ne.s32.totalorder %s63, %s65
      %p72 = scmp.eq.s32.totalorder %s22, 1
      %p73 = por %p71, %p72
      %p74 = scmp.ne.s32.totalorder %s65, %s66
      %p75 = scmp.eq.s32.totalorder %s22, 0
      %p76 = por %p74, %p75
      %p77 = scmp.ne.s32.totalorder %s65, %s66
      %p78 = scmp.eq.s32.totalorder %s23, 1
      %p79 = por %p77, %p78
      %p81 = scmp.ne.s32.totalorder %s66, %s80
      %p82 = scmp.eq.s32.totalorder %s23, 0
      %p83 = por %p81, %p82
      %s85 = sadd.s32 %s84, 1
      %p88 = scmp.eq.s32.totalorder %s17, 1
      %p89 = scmp.ne.s32.totalorder %s84, %s86
      %p90 = scmp.eq.s32.totalorder %s17, 0
      %p91 = por %p89, %p90
      %p92 = scmp.ne.s32.totalorder %s84, %s86
      %p93 = scmp.eq.s32.totalorder %s22, 1
      %p94 = por %p92, %p93
      %p95 = scmp.ne.s32.totalorder %s86, %s87
      %p96 = scmp.eq.s32.totalorder %s22, 0
      %p97 = por %p95, %p96
      %p98 = scmp.ne.s32.totalorder %s86, %s87
      %p99 = scmp.eq.s32.totalorder %s23, 1
      %p100 = por %p98, %p99
      %p102 = scmp.ne.s32.totalorder %s87, %s101
      %p103 = scmp.eq.s32.totalorder %s23, 0
      %p104 = por %p102, %p103
      %s106 = sadd.s32 %s105, 1
      %p109 = scmp.eq.s32.totalorder %s17, 1
      %p110 = scmp.ne.s32.totalorder %s105, %s107
      %p111 = scmp.eq.s32.totalorder %s17, 0
      %p112 = por %p110, %p111
      %p113 = scmp.ne.s32.totalorder %s105, %s107
      %p114 = scmp.eq.s32.totalorder %s22, 1
      %p115 = por %p113, %p114
      %p116 = scmp.ne.s32.totalorder %s107, %s108
      %p117 = scmp.eq.s32.totalorder %s22, 0
      %p118 = por %p116, %p117
      %p119 = scmp.ne.s32.totalorder %s107, %s108
      %p120 = scmp.eq.s32.totalorder %s23, 1
      %p121 = por %p119, %p120
      %p123 = scmp.ne.s32.totalorder %s108, %s122
      %p124 = scmp.eq.s32.totalorder %s23, 0
      %p125 = por %p123, %p124
      %s127 = sadd.s32 %s126, 1
      %p130 = scmp.eq.s32.totalorder %s17, 1
      %p131 = scmp.ne.s32.totalorder %s126, %s128
      %p132 = scmp.eq.s32.totalorder %s17, 0
      %p133 = por %p131, %p132
      %p134 = scmp.ne.s32.totalorder %s126, %s128
      %p135 = scmp.eq.s32.totalorder %s22, 1
      %p136 = por %p134, %p135
      %p137 = scmp.ne.s32.totalorder %s128, %s129
      %p138 = scmp.eq.s32.totalorder %s22, 0
      %p139 = por %p137, %p138
      %p140 = scmp.ne.s32.totalorder %s128, %s129
      %p141 = scmp.eq.s32.totalorder %s23, 1
      %p142 = por %p140, %p141
      %p144 = scmp.ne.s32.totalorder %s129, %s143
      %p145 = scmp.eq.s32.totalorder %s23, 0
      %p146 = por %p144, %p145
      %s147 = ssub.s32 %s24, %s36
      %p148 = scmp.eq.s32.totalorder %s147, 0
      %s150 = sadd.s32 %s149, 1
      %s151 = scalar_select %p148, %s149, %s150
      %p154 = pneg %p148
      %p155 = scmp.eq.s32.totalorder %s17, 1
      %p156 = por %p154, %p155
      %p157 = scmp.ne.s32.totalorder %s149, %s152
      %p158 = scmp.eq.s32.totalorder %s17, 0
      %p159 = por %p157, %p158
      %p160 = scmp.ne.s32.totalorder %s149, %s152
      %p161 = scmp.eq.s32.totalorder %s22, 1
      %p162 = por %p160, %p161
      %p163 = scmp.ne.s32.totalorder %s152, %s153
      %p164 = scmp.eq.s32.totalorder %s22, 0
      %p165 = por %p163, %p164
      %p166 = scmp.ne.s32.totalorder %s152, %s153
      %p167 = scmp.eq.s32.totalorder %s23, 1
      %p168 = por %p166, %p167
      %p170 = scmp.ne.s32.totalorder %s153, %s169
      %p171 = scmp.eq.s32.totalorder %s23, 0
      %p172 = por %p170, %p171
      %p173 = scmp.le.s32.totalorder 1, %s17
      %p174 = scmp.lt.s32.totalorder %s17, 3
      %p175 = pnand %p173, %p174
      %p176 = pneg %p175
      // Predicated region
      $region9: #{tpu_custom_call.1} parent=5 // pred_check
        _
      $region10: #{tpu_custom_call.1} parent=5 // pred_check_branch
        %178 = sbr.rel (%p175) target = $region12
      $region11: #{tpu_custom_call.1} parent=5 // pred_region
        %s179 = ssub.s32 %s17, 1
        // Predicated region
        $region13: #{tpu_custom_call.1} parent=11 // pred_check
          %p180 = pneg %p76
        $region14: #{tpu_custom_call.1} parent=11 // pred_check_branch
          %182 = sbr.rel (%p180) target = $region16
        $region15: #{tpu_custom_call.1} parent=11 // pred_region
          _
        $region16: #{tpu_custom_call.1} parent=11 // pred_fallthru
          _
        // Predicated region
        $region17: #{tpu_custom_call.1} parent=11 // pred_check
          %p183 = pneg %p97
        $region18: #{tpu_custom_call.1} parent=11 // pred_check_branch
          %185 = sbr.rel (%p183) target = $region20
        $region19: #{tpu_custom_call.1} parent=11 // pred_region
          _
        $region20: #{tpu_custom_call.1} parent=11 // pred_fallthru
          _
        // Predicated region
        $region21: #{tpu_custom_call.1} parent=11 // pred_check
          %p186 = pneg %p118
        $region22: #{tpu_custom_call.1} parent=11 // pred_check_branch
          %188 = sbr.rel (%p186) target = $region24
        $region23: #{tpu_custom_call.1} parent=11 // pred_region
          _
        $region24: #{tpu_custom_call.1} parent=11 // pred_fallthru
          _
        // Predicated region
        $region25: #{tpu_custom_call.1} parent=11 // pred_check
          %p189 = pneg %p139
        $region26: #{tpu_custom_call.1} parent=11 // pred_check_branch
          %191 = sbr.rel (%p189) target = $region28
        $region27: #{tpu_custom_call.1} parent=11 // pred_region
          _
        $region28: #{tpu_custom_call.1} parent=11 // pred_fallthru
          _
      $region12: #{tpu_custom_call.1} parent=5 // pred_fallthru
        _
      %p192 = scmp.lt.s32.totalorder %s17, 2
      // Predicated region
      $region29: #{tpu_custom_call.1} parent=5 // pred_check
        %p193 = pneg %p192
      $region30: #{tpu_custom_call.1} parent=5 // pred_check_branch
        %195 = sbr.rel (%p193) target = $region32
      $region31: #{tpu_custom_call.1} parent=5 // pred_region
        // Predicated region
        $region33: #{tpu_custom_call.1} parent=31 // pred_check
          %p196 = pneg %p49
        $region34: #{tpu_custom_call.1} parent=31 // pred_check_branch
          %198 = sbr.rel (%p196) target = $region36
        $region35: #{tpu_custom_call.1} parent=31 // pred_region
          %s199 = sand.u32 %s39, 1
          %s200 = scalar_lea.sflag [#allocation5], %s199
          %s201 = sand.u32 %s39, 1
          %s202 = smul.addr %s201, 4
          %s203 = scalar_lea.vmem [#allocation4], %s202
          %s205 = ssub.s32 64, 64
          %206 = vsyncadd %s200, %s205
          %s207 = smul.addr %s24, 2
          %s208 = smul.addr %s207, 32
          %s209 = scalar_lea.hbm %s0, %s208
          %s211 = sshll.u32 %s203, 4
          %s212 = int_to_ptr.vmem [resolvable:$true] %s211
          %214 = dma.hbm_to_vmem [thread:$0]  %s209, 64, %s212, %s200
        $region36: #{tpu_custom_call.1} parent=31 // pred_fallthru
          _
      $region32: #{tpu_custom_call.1} parent=5 // pred_fallthru
        _
      %p215 = scmp.le.s32.totalorder 1, %s17
      %p216 = scmp.lt.s32.totalorder %s17, 3
      %p217 = pnand %p215, %p216
      %p218 = pneg %p217
      // Predicated region
      $region37: #{tpu_custom_call.1} parent=5 // pred_check
        _
      $region38: #{tpu_custom_call.1} parent=5 // pred_check_branch
        %220 = sbr.rel (%p217) target = $region40
      $region39: #{tpu_custom_call.1} parent=5 // pred_region
        %s221 = ssub.s32 %s17, 1
        %s222 = sand.u32 %s42, 1
        %s223 = scalar_lea.sflag [#allocation5], %s222
        %s224 = sand.u32 %s42, 1
        %s225 = smul.addr %s224, 4
        %s226 = scalar_lea.vmem [#allocation4], %s225
        // Predicated region
        $region41: #{tpu_custom_call.1} parent=39 // pred_check
          %p227 = pneg %p55
        $region42: #{tpu_custom_call.1} parent=39 // pred_check_branch
          %229 = sbr.rel (%p227) target = $region44
        $region43: #{tpu_custom_call.1} parent=39 // pred_region
          %230 = dma.done %s223, 64
        $region44: #{tpu_custom_call.1} parent=39 // pred_fallthru
          _
        %s231 = sand.u32 %s42, 1
        %s232 = scalar_lea.sflag [#allocation5], %s231
        %s233 = sand.u32 %s42, 1
        %s234 = smul.addr %s233, 4
        %s235 = scalar_lea.vmem [#allocation4], %s234
        %p236 = pneg %p55
        %p237 = pneg %p52
        %p238 = pneg %p76
        %p239 = pneg %p73
        %p240 = pneg %p97
        %p241 = pneg %p94
        %p242 = pneg %p118
        %p243 = pneg %p115
        %p244 = pneg %p139
        %p245 = pneg %p136
        %p246 = pneg %p165
        %p247 = pneg %p162
        %s248 = sand.u32 %s152, 1
        %s249 = scalar_lea.sflag [#allocation6], %s248
        %s250 = sand.u32 %s152, 1
        %s251 = smul.addr %s250, 8
        %s252 = scalar_lea.vmem [#allocation7], %s251
        %p254 = scmp.eq.s32.totalorder %s27, 0
        // Predicated region
        $region45: #{tpu_custom_call.1} parent=39 // pred_check
          %p255 = pneg %p254
        $region46: #{tpu_custom_call.1} parent=39 // pred_check_branch
          %257 = sbr.rel (%p255) target = $region48
        $region47: #{tpu_custom_call.1} parent=39 // pred_region
          %v258 = vld [vmem:[%s2] sm:$0x1]
          %v259 = vld [vmem:[%s226] sm:$0x3]
          %vm260 = vcmask 31744
          %v262 = vsel %vm260, %v258, 0
          %vm264 = vcmask 1041408
          %v266 = vsel %vm264, %v259, 0
          %268 = vmatprep.subr.bf16.mxu0 0
          %269 = vmatpush1.bf16.msra.mxu0 %v266
          %270 = vmatprep.subr.bf16.mxu0 0
          %271 = vmatpush1.bf16.msra.mxu0 0
          %272 = vmatprep.subr.bf16.mxu0 0
          %273 = vmatpush1.bf16.msra.mxu0 0
          %274 = vmatprep.subr.bf16.mxu0 0
          %275 = vmatpush1.bf16.msra.mxu0 0
          %276 = vmatprep.subr.bf16.mxu0 0
          %277 = vmatpush1.bf16.msra.mxu0 0
          %278 = vmatprep.subr.bf16.mxu0 0
          %279 = vmatpush1.bf16.msra.mxu0 0
          %280 = vmatprep.subr.bf16.mxu0 0
          %281 = vmatpush1.bf16.msra.mxu0 0
          %282 = vmatprep.subr.bf16.mxu0 0
          %283 = vmatpush1.bf16.msra.mxu0 0
          %284 = vmatprep.subr.bf16.mxu0 0
          %285 = vmatpush1.bf16.msra.mxu0 0
          %286 = vmatprep.subr.bf16.mxu0 0
          %287 = vmatpush1.bf16.msra.mxu0 0
          %288 = vmatprep.subr.bf16.mxu0 0
          %289 = vmatpush1.bf16.msra.mxu0 0
          %290 = vmatprep.subr.bf16.mxu0 0
          %291 = vmatpush1.bf16.msra.mxu0 0
          %292 = vmatprep.subr.bf16.mxu0 0
          %293 = vmatpush1.bf16.msra.mxu0 0
          %294 = vmatprep.subr.bf16.mxu0 0
          %295 = vmatpush1.bf16.msra.mxu0 0
          %296 = vmatprep.subr.bf16.mxu0 0
          %297 = vmatpush1.bf16.msra.mxu0 0
          %298 = vmatprep.subr.bf16.mxu0 0
          %299 = vmatpush1.bf16.msra.mxu0 0
          %300 = vmatprep.mubr.bf16.mxu0 0
          %301 = vmatmul.mubr.bf16.gmra.mrb[0].mxu0 %v262
          %v302 = vpop.f32.mrb[0].mxu0
          %v303 = vadd.f32 0.0, %v302
          %v304 = vpop.f32.mrb[0].mxu0
          %v305 = vpop.f32.mrb[0].mxu0
          %v306 = vpop.f32.mrb[0].mxu0
          %307 = vdwg.mxu0
          %v308 = vld [vmem:[%s226 + $0x2] sm:$0x3]
          %v310 = vsel %vm264, %v308, 0
          %312 = vmatprep.subr.bf16.mxu0 0
          %313 = vmatpush1.bf16.msra.mxu0 %v310
          %314 = vmatprep.subr.bf16.mxu0 0
          %315 = vmatpush1.bf16.msra.mxu0 0
          %316 = vmatprep.subr.bf16.mxu0 0
          %317 = vmatpush1.bf16.msra.mxu0 0
          %318 = vmatprep.subr.bf16.mxu0 0
          %319 = vmatpush1.bf16.msra.mxu0 0
          %320 = vmatprep.subr.bf16.mxu0 0
          %321 = vmatpush1.bf16.msra.mxu0 0
          %322 = vmatprep.subr.bf16.mxu0 0
          %323 = vmatpush1.bf16.msra.mxu0 0
          %324 = vmatprep.subr.bf16.mxu0 0
          %325 = vmatpush1.bf16.msra.mxu0 0
          %326 = vmatprep.subr.bf16.mxu0 0
          %327 = vmatpush1.bf16.msra.mxu0 0
          %328 = vmatprep.subr.bf16.mxu0 0
          %329 = vmatpush1.bf16.msra.mxu0 0
          %330 = vmatprep.subr.bf16.mxu0 0
          %331 = vmatpush1.bf16.msra.mxu0 0
          %332 = vmatprep.subr.bf16.mxu0 0
          %333 = vmatpush1.bf16.msra.mxu0 0
          %334 = vmatprep.subr.bf16.mxu0 0
          %335 = vmatpush1.bf16.msra.mxu0 0
          %336 = vmatprep.subr.bf16.mxu0 0
          %337 = vmatpush1.bf16.msra.mxu0 0
          %338 = vmatprep.subr.bf16.mxu0 0
          %339 = vmatpush1.bf16.msra.mxu0 0
          %340 = vmatprep.subr.bf16.mxu0 0
          %341 = vmatpush1.bf16.msra.mxu0 0
          %342 = vmatprep.subr.bf16.mxu0 0
          %343 = vmatpush1.bf16.msra.mxu0 0
          %344 = vmatprep.mubr.bf16.mxu0 0
          %345 = vmatmul.mubr.bf16.gmra.mrb[0].mxu0 %v262
          %v346 = vpop.f32.mrb[0].mxu0
          %v347 = vadd.f32 0.0, %v346
          %v348 = vpop.f32.mrb[0].mxu0
          %v349 = vpop.f32.mrb[0].mxu0
          %v350 = vpop.f32.mrb[0].mxu0
          %351 = vdwg.mxu0
          %v353 = vrot.slane %v347, 6
          %v355 = vsel %vm264, %v303, %v353
          %v356 = vpack.c.bf16 %v355, %v355
          %357 = vst [vmem:[#allocation2] sm:$0x3] %v356
        $region48: #{tpu_custom_call.1} parent=39 // pred_fallthru
          _
        %s358 = smul.u32 %s27, 128
        %s359 = sadd.s32 %s358, 128
        %s360 = sshra.s32 %s358, 7
        %s361 = sand.u32 %s358, 127
        %s362 = smul.addr %s360, 2
        %s363 = scalar_lea.vmem %s226, %s362 [#allocation4]
        %v364 = vld [vmem:[%s363] sm:$0x3]
        %s365 = sshra.s32 %s359, 7
        %s366 = sand.u32 %s359, 127
        %s367 = smul.addr %s365, 2
        %s368 = scalar_lea.vmem %s226, %s367 [#allocation4]
        %v369 = vld [vmem:[%s368] sm:$0x3]
        %v370 = vld [vmem:[%s1] sm:$0x1]
        %vm371 = vcmask 31744
        %v373 = vsel %vm371, %v370, 0
        %vm375 = vcmask 1041408
        %v377 = vsel %vm375, %v364, 0
        %379 = vmatprep.subr.bf16.mxu0 0
        %380 = vmatpush1.bf16.msra.mxu0 %v377
        %381 = vmatprep.subr.bf16.mxu0 0
        %382 = vmatpush1.bf16.msra.mxu0 0
        %383 = vmatprep.subr.bf16.mxu0 0
        %384 = vmatpush1.bf16.msra.mxu0 0
        %385 = vmatprep.subr.bf16.mxu0 0
        %386 = vmatpush1.bf16.msra.mxu0 0
        %387 = vmatprep.subr.bf16.mxu0 0
        %388 = vmatpush1.bf16.msra.mxu0 0
        %389 = vmatprep.subr.bf16.mxu0 0
        %390 = vmatpush1.bf16.msra.mxu0 0
        %391 = vmatprep.subr.bf16.mxu0 0
        %392 = vmatpush1.bf16.msra.mxu0 0
        %393 = vmatprep.subr.bf16.mxu0 0
        %394 = vmatpush1.bf16.msra.mxu0 0
        %395 = vmatprep.subr.bf16.mxu0 0
        %396 = vmatpush1.bf16.msra.mxu0 0
        %397 = vmatprep.subr.bf16.mxu0 0
        %398 = vmatpush1.bf16.msra.mxu0 0
        %399 = vmatprep.subr.bf16.mxu0 0
        %400 = vmatpush1.bf16.msra.mxu0 0
        %401 = vmatprep.subr.bf16.mxu0 0
        %402 = vmatpush1.bf16.msra.mxu0 0
        %403 = vmatprep.subr.bf16.mxu0 0
        %404 = vmatpush1.bf16.msra.mxu0 0
        %405 = vmatprep.subr.bf16.mxu0 0
        %406 = vmatpush1.bf16.msra.mxu0 0
        %407 = vmatprep.subr.bf16.mxu0 0
        %408 = vmatpush1.bf16.msra.mxu0 0
        %409 = vmatprep.subr.bf16.mxu0 0
        %410 = vmatpush1.bf16.msra.mxu0 0
        %411 = vmatprep.mubr.bf16.mxu0 0
        %412 = vmatmul.mubr.bf16.gmra.mrb[0].mxu0 %v373
        %v413 = vpop.f32.mrb[0].mxu0
        %v414 = vadd.f32 0.0, %v413
        %v415 = vpop.f32.mrb[0].mxu0
        %v416 = vpop.f32.mrb[0].mxu0
        %v417 = vpop.f32.mrb[0].mxu0
        %418 = vdwg.mxu0
        %v420 = vsel %vm375, %v369, 0
        %422 = vmatprep.subr.bf16.mxu0 0
        %423 = vmatpush1.bf16.msra.mxu0 %v420
        %424 = vmatprep.subr.bf16.mxu0 0
        %425 = vmatpush1.bf16.msra.mxu0 0
        %426 = vmatprep.subr.bf16.mxu0 0
        %427 = vmatpush1.bf16.msra.mxu0 0
        %428 = vmatprep.subr.bf16.mxu0 0
        %429 = vmatpush1.bf16.msra.mxu0 0
        %430 = vmatprep.subr.bf16.mxu0 0
        %431 = vmatpush1.bf16.msra.mxu0 0
        %432 = vmatprep.subr.bf16.mxu0 0
        %433 = vmatpush1.bf16.msra.mxu0 0
        %434 = vmatprep.subr.bf16.mxu0 0
        %435 = vmatpush1.bf16.msra.mxu0 0
        %436 = vmatprep.subr.bf16.mxu0 0
        %437 = vmatpush1.bf16.msra.mxu0 0
        %438 = vmatprep.subr.bf16.mxu0 0
        %439 = vmatpush1.bf16.msra.mxu0 0
        %440 = vmatprep.subr.bf16.mxu0 0
        %441 = vmatpush1.bf16.msra.mxu0 0
        %442 = vmatprep.subr.bf16.mxu0 0
        %443 = vmatpush1.bf16.msra.mxu0 0
        %444 = vmatprep.subr.bf16.mxu0 0
        %445 = vmatpush1.bf16.msra.mxu0 0
        %446 = vmatprep.subr.bf16.mxu0 0
        %447 = vmatpush1.bf16.msra.mxu0 0
        %448 = vmatprep.subr.bf16.mxu0 0
        %449 = vmatpush1.bf16.msra.mxu0 0
        %450 = vmatprep.subr.bf16.mxu0 0
        %451 = vmatpush1.bf16.msra.mxu0 0
        %452 = vmatprep.subr.bf16.mxu0 0
        %453 = vmatpush1.bf16.msra.mxu0 0
        %454 = vmatprep.mubr.bf16.mxu0 0
        %455 = vmatmul.mubr.bf16.gmra.mrb[0].mxu0 %v373
        %v456 = vpop.f32.mrb[0].mxu0
        %v457 = vadd.f32 0.0, %v456
        %v458 = vpop.f32.mrb[0].mxu0
        %v459 = vpop.f32.mrb[0].mxu0
        %v460 = vpop.f32.mrb[0].mxu0
        %461 = vdwg.mxu0
        %v463 = vrot.slane %v457, 6
        %v465 = vsel %vm375, %v414, %v463
        %v466 = vpack.c.bf16 %v465, %v465
        %v467 = vld [vmem:[%s3] sm:$0x1]
        %v469 = vsel %vm371, %v467, 0
        %471 = vmatprep.subr.bf16.mxu0 0
        %472 = vmatpush1.bf16.msra.mxu0 %v377
        %473 = vmatprep.subr.bf16.mxu0 0
        %474 = vmatpush1.bf16.msra.mxu0 0
        %475 = vmatprep.subr.bf16.mxu0 0
        %476 = vmatpush1.bf16.msra.mxu0 0
        %477 = vmatprep.subr.bf16.mxu0 0
        %478 = vmatpush1.bf16.msra.mxu0 0
        %479 = vmatprep.subr.bf16.mxu0 0
        %480 = vmatpush1.bf16.msra.mxu0 0
        %481 = vmatprep.subr.bf16.mxu0 0
        %482 = vmatpush1.bf16.msra.mxu0 0
        %483 = vmatprep.subr.bf16.mxu0 0
        %484 = vmatpush1.bf16.msra.mxu0 0
        %485 = vmatprep.subr.bf16.mxu0 0
        %486 = vmatpush1.bf16.msra.mxu0 0
        %487 = vmatprep.subr.bf16.mxu0 0
        %488 = vmatpush1.bf16.msra.mxu0 0
        %489 = vmatprep.subr.bf16.mxu0 0
        %490 = vmatpush1.bf16.msra.mxu0 0
        %491 = vmatprep.subr.bf16.mxu0 0
        %492 = vmatpush1.bf16.msra.mxu0 0
        %493 = vmatprep.subr.bf16.mxu0 0
        %494 = vmatpush1.bf16.msra.mxu0 0
        %495 = vmatprep.subr.bf16.mxu0 0
        %496 = vmatpush1.bf16.msra.mxu0 0
        %497 = vmatprep.subr.bf16.mxu0 0
        %498 = vmatpush1.bf16.msra.mxu0 0
        %499 = vmatprep.subr.bf16.mxu0 0
        %500 = vmatpush1.bf16.msra.mxu0 0
        %501 = vmatprep.subr.bf16.mxu0 0
        %502 = vmatpush1.bf16.msra.mxu0 0
        %503 = vmatprep.mubr.bf16.mxu0 0
        %504 = vmatmul.mubr.bf16.gmra.mrb[0].mxu0 %v469
        %v505 = vpop.f32.mrb[0].mxu0
        %v506 = vadd.f32 0.0, %v505
        %v507 = vpop.f32.mrb[0].mxu0
        %v508 = vpop.f32.mrb[0].mxu0
        %v509 = vpop.f32.mrb[0].mxu0
        %510 = vdwg.mxu0
        %511 = vmatprep.subr.bf16.mxu0 0
        %512 = vmatpush1.bf16.msra.mxu0 %v420
        %513 = vmatprep.subr.bf16.mxu0 0
        %514 = vmatpush1.bf16.msra.mxu0 0
        %515 = vmatprep.subr.bf16.mxu0 0
        %516 = vmatpush1.bf16.msra.mxu0 0
        %517 = vmatprep.subr.bf16.mxu0 0
        %518 = vmatpush1.bf16.msra.mxu0 0
        %519 = vmatprep.subr.bf16.mxu0 0
        %520 = vmatpush1.bf16.msra.mxu0 0
        %521 = vmatprep.subr.bf16.mxu0 0
        %522 = vmatpush1.bf16.msra.mxu0 0
        %523 = vmatprep.subr.bf16.mxu0 0
        %524 = vmatpush1.bf16.msra.mxu0 0
        %525 = vmatprep.subr.bf16.mxu0 0
        %526 = vmatpush1.bf16.msra.mxu0 0
        %527 = vmatprep.subr.bf16.mxu0 0
        %528 = vmatpush1.bf16.msra.mxu0 0
        %529 = vmatprep.subr.bf16.mxu0 0
        %530 = vmatpush1.bf16.msra.mxu0 0
        %531 = vmatprep.subr.bf16.mxu0 0
        %532 = vmatpush1.bf16.msra.mxu0 0
        %533 = vmatprep.subr.bf16.mxu0 0
        %534 = vmatpush1.bf16.msra.mxu0 0
        %535 = vmatprep.subr.bf16.mxu0 0
        %536 = vmatpush1.bf16.msra.mxu0 0
        %537 = vmatprep.subr.bf16.mxu0 0
        %538 = vmatpush1.bf16.msra.mxu0 0
        %539 = vmatprep.subr.bf16.mxu0 0
        %540 = vmatpush1.bf16.msra.mxu0 0
        %541 = vmatprep.subr.bf16.mxu0 0
        %542 = vmatpush1.bf16.msra.mxu0 0
        %543 = vmatprep.mubr.bf16.mxu0 0
        %544 = vmatmul.mubr.bf16.gmra.mrb[0].mxu0 %v469
        %v545 = vpop.f32.mrb[0].mxu0
        %v546 = vadd.f32 0.0, %v545
        %v547 = vpop.f32.mrb[0].mxu0
        %v548 = vpop.f32.mrb[0].mxu0
        %v549 = vpop.f32.mrb[0].mxu0
        %550 = vdwg.mxu0
        %v552 = vrot.slane %v546, 6
        %v554 = vsel %vm375, %v506, %v552
        %v555 = vpack.c.bf16 %v554, %v554
        %v556 = vld [vmem:[#allocation2] sm:$0x3]
        %557 = vxpose.xlu0.c.b16.start [1/8] %v466, 128
        %558 = vxpose.xlu0.c.b16.cont [2/8] 0, 128
        %559 = vxpose.xlu0.c.b16.cont [3/8] 0, 128
        %560 = vxpose.xlu0.c.b16.cont [4/8] 0, 128
        %561 = vxpose.xlu0.c.b16.cont [5/8] 0, 128
        %562 = vxpose.xlu0.c.b16.cont [6/8] 0, 128
        %563 = vxpose.xlu0.c.b16.cont [7/8] 0, 128
        %564 = vxpose.xlu0.c.b16.end [8/8] 0, 128
        %v565 = vpop.trf.xlu0
        %v566 = vpop.trf.xlu0
        %v567 = vpop.trf.xlu0
        %v568 = vpop.trf.xlu0
        %v569 = vpop.trf.xlu0
        %v570 = vpop.trf.xlu0
        %v571 = vpop.trf.xlu0
        %v572 = vpop.trf.xlu0
        %v574 = vsel %vm371, %v565, 0
        %v577 = vsel %vm371, %v566, 0
        %v580 = vsel %vm371, %v567, 0
        %v583 = vsel %vm371, %v568, 0
        %v586 = vsel %vm371, %v569, 0
        %v589 = vsel %vm371, %v570, 0
        %v592 = vsel %vm371, %v571, 0
        %v595 = vsel %vm371, %v572, 0
        %v598 = vsel %vm375, %v556, 0
        %600 = vmatprep.subr.bf16.mxu0 0
        %601 = vmatpush1.bf16.msra.mxu0 %v598
        %602 = vmatprep.subr.bf16.mxu0 0
        %603 = vmatpush1.bf16.msra.mxu0 0
        %604 = vmatprep.subr.bf16.mxu0 0
        %605 = vmatpush1.bf16.msra.mxu0 0
        %606 = vmatprep.subr.bf16.mxu0 0
        %607 = vmatpush1.bf16.msra.mxu0 0
        %608 = vmatprep.subr.bf16.mxu0 0
        %609 = vmatpush1.bf16.msra.mxu0 0
        %610 = vmatprep.subr.bf16.mxu0 0
        %611 = vmatpush1.bf16.msra.mxu0 0
        %612 = vmatprep.subr.bf16.mxu0 0
        %613 = vmatpush1.bf16.msra.mxu0 0
        %614 = vmatprep.subr.bf16.mxu0 0
        %615 = vmatpush1.bf16.msra.mxu0 0
        %616 = vmatprep.subr.bf16.mxu0 0
        %617 = vmatpush1.bf16.msra.mxu0 0
        %618 = vmatprep.subr.bf16.mxu0 0
        %619 = vmatpush1.bf16.msra.mxu0 0
        %620 = vmatprep.subr.bf16.mxu0 0
        %621 = vmatpush1.bf16.msra.mxu0 0
        %622 = vmatprep.subr.bf16.mxu0 0
        %623 = vmatpush1.bf16.msra.mxu0 0
        %624 = vmatprep.subr.bf16.mxu0 0
        %625 = vmatpush1.bf16.msra.mxu0 0
        %626 = vmatprep.subr.bf16.mxu0 0
        %627 = vmatpush1.bf16.msra.mxu0 0
        %628 = vmatprep.subr.bf16.mxu0 0
        %629 = vmatpush1.bf16.msra.mxu0 0
        %630 = vmatprep.subr.bf16.mxu0 0
        %631 = vmatpush1.bf16.msra.mxu0 0
        %632 = vmatprep.mubr.bf16.mxu0 0
        %633 = vmatmul.mubr.bf16.gmra.mrb[0].mxu0 %v574
        %v634 = vpop.f32.mrb[0].mxu0
        %v635 = vadd.f32 0.0, %v634
        %v636 = vpop.f32.mrb[0].mxu0
        %v637 = vpop.f32.mrb[0].mxu0
        %v638 = vadd.f32 0.0, %v637
        %v639 = vpop.f32.mrb[0].mxu0
        %640 = vmatprep.mubr.bf16.mxu0 0
        %641 = vmatmul.mubr.bf16.gmra.mrb[0].mxu0 %v577
        %v642 = vpop.f32.mrb[0].mxu0
        %v643 = vadd.f32 0.0, %v642
        %v644 = vpop.f32.mrb[0].mxu0
        %v645 = vpop.f32.mrb[0].mxu0
        %v646 = vadd.f32 0.0, %v645
        %v647 = vpop.f32.mrb[0].mxu0
        %648 = vmatprep.mubr.bf16.mxu0 0
        %649 = vmatmul.mubr.bf16.gmra.mrb[0].mxu0 %v580
        %v650 = vpop.f32.mrb[0].mxu0
        %v651 = vadd.f32 0.0, %v650
        %v652 = vpop.f32.mrb[0].mxu0
        %v653 = vpop.f32.mrb[0].mxu0
        %v654 = vadd.f32 0.0, %v653
        %v655 = vpop.f32.mrb[0].mxu0
        %656 = vmatprep.mubr.bf16.mxu0 0
        %657 = vmatmul.mubr.bf16.gmra.mrb[0].mxu0 %v583
        %v658 = vpop.f32.mrb[0].mxu0
        %v659 = vadd.f32 0.0, %v658
        %v660 = vpop.f32.mrb[0].mxu0
        %v661 = vpop.f32.mrb[0].mxu0
        %v662 = vadd.f32 0.0, %v661
        %v663 = vpop.f32.mrb[0].mxu0
        %664 = vmatprep.mubr.bf16.mxu0 0
        %665 = vmatmul.mubr.bf16.gmra.mrb[0].mxu0 %v586
        %v666 = vpop.f32.mrb[0].mxu0
        %v667 = vadd.f32 0.0, %v666
        %v668 = vpop.f32.mrb[0].mxu0
        %v669 = vpop.f32.mrb[0].mxu0
        %v670 = vadd.f32 0.0, %v669
        %v671 = vpop.f32.mrb[0].mxu0
        %672 = vmatprep.mubr.bf16.mxu0 0
        %673 = vmatmul.mubr.bf16.gmra.mrb[0].mxu0 %v589
        %v674 = vpop.f32.mrb[0].mxu0
        %v675 = vadd.f32 0.0, %v674
        %v676 = vpop.f32.mrb[0].mxu0
        %v677 = vpop.f32.mrb[0].mxu0
        %v678 = vadd.f32 0.0, %v677
        %v679 = vpop.f32.mrb[0].mxu0
        %680 = vmatprep.mubr.bf16.mxu0 0
        %681 = vmatmul.mubr.bf16.gmra.mrb[0].mxu0 %v592
        %v682 = vpop.f32.mrb[0].mxu0
        %v683 = vadd.f32 0.0, %v682
        %v684 = vpop.f32.mrb[0].mxu0
        %v685 = vpop.f32.mrb[0].mxu0
        %v686 = vadd.f32 0.0, %v685
        %v687 = vpop.f32.mrb[0].mxu0
        %688 = vmatprep.mubr.bf16.mxu0 0
        %689 = vmatmul.mubr.bf16.gmra.mrb[0].mxu0 %v595
        %v690 = vpop.f32.mrb[0].mxu0
        %v691 = vadd.f32 0.0, %v690
        %v692 = vpop.f32.mrb[0].mxu0
        %v693 = vpop.f32.mrb[0].mxu0
        %v694 = vadd.f32 0.0, %v693
        %v695 = vpop.f32.mrb[0].mxu0
        %696 = vdwg.mxu0
        %697 = vmax.xlane.f32.xlu0 %v635
        %v698 = vpop.xlane.xlu0 %697
        %699 = vmax.xlane.f32.xlu0 %v638
        %v700 = vpop.xlane.xlu0 %699
        %701 = vmax.xlane.f32.xlu0 %v643
        %v702 = vpop.xlane.xlu0 %701
        %703 = vmax.xlane.f32.xlu0 %v646
        %v704 = vpop.xlane.xlu0 %703
        %705 = vmax.xlane.f32.xlu0 %v651
        %v706 = vpop.xlane.xlu0 %705
        %707 = vmax.xlane.f32.xlu0 %v654
        %v708 = vpop.xlane.xlu0 %707
        %709 = vmax.xlane.f32.xlu0 %v659
        %v710 = vpop.xlane.xlu0 %709
        %711 = vmax.xlane.f32.xlu0 %v662
        %v712 = vpop.xlane.xlu0 %711
        %713 = vmax.xlane.f32.xlu0 %v667
        %v714 = vpop.xlane.xlu0 %713
        %715 = vmax.xlane.f32.xlu0 %v670
        %v716 = vpop.xlane.xlu0 %715
        %717 = vmax.xlane.f32.xlu0 %v675
        %v718 = vpop.xlane.xlu0 %717
        %719 = vmax.xlane.f32.xlu0 %v678
        %v720 = vpop.xlane.xlu0 %719
        %721 = vmax.xlane.f32.xlu0 %v683
        %v722 = vpop.xlane.xlu0 %721
        %723 = vmax.xlane.f32.xlu0 %v686
        %v724 = vpop.xlane.xlu0 %723
        %725 = vmax.xlane.f32.xlu0 %v691
        %v726 = vpop.xlane.xlu0 %725
        %727 = vmax.xlane.f32.xlu0 %v694
        %v728 = vpop.xlane.xlu0 %727
        %v729 = vsub.f32 %v635, %v698
        %v730 = vsub.f32 %v638, %v700
        %v731 = vsub.f32 %v643, %v702
        %v732 = vsub.f32 %v646, %v704
        %v733 = vsub.f32 %v651, %v706
        %v734 = vsub.f32 %v654, %v708
        %v735 = vsub.f32 %v659, %v710
        %v736 = vsub.f32 %v662, %v712
        %v737 = vsub.f32 %v667, %v714
        %v738 = vsub.f32 %v670, %v716
        %v739 = vsub.f32 %v675, %v718
        %v740 = vsub.f32 %v678, %v720
        %v741 = vsub.f32 %v683, %v722
        %v742 = vsub.f32 %v686, %v724
        %v743 = vsub.f32 %v691, %v726
        %v744 = vsub.f32 %v694, %v728
        %v745 = vmul.f32 %v729, 1.442695
        %v746 = vpow.pop %v745
        %v747 = vmul.f32 %v730, 1.442695
        %v748 = vpow.pop %v747
        %v749 = vmul.f32 %v731, 1.442695
        %v750 = vpow.pop %v749
        %v751 = vmul.f32 %v732, 1.442695
        %v752 = vpow.pop %v751
        %v753 = vmul.f32 %v733, 1.442695
        %v754 = vpow.pop %v753
        %v755 = vmul.f32 %v734, 1.442695
        %v756 = vpow.pop %v755
        %v757 = vmul.f32 %v735, 1.442695
        %v758 = vpow.pop %v757
        %v759 = vmul.f32 %v736, 1.442695
        %v760 = vpow.pop %v759
        %v761 = vmul.f32 %v737, 1.442695
        %v762 = vpow.pop %v761
        %v763 = vmul.f32 %v738, 1.442695
        %v764 = vpow.pop %v763
        %v765 = vmul.f32 %v739, 1.442695
        %v766 = vpow.pop %v765
        %v767 = vmul.f32 %v740, 1.442695
        %v768 = vpow.pop %v767
        %v769 = vmul.f32 %v741, 1.442695
        %v770 = vpow.pop %v769
        %v771 = vmul.f32 %v742, 1.442695
        %v772 = vpow.pop %v771
        %v773 = vmul.f32 %v743, 1.442695
        %v774 = vpow.pop %v773
        %v775 = vmul.f32 %v744, 1.442695
        %v776 = vpow.pop %v775
        %777 = vadd.xlane.f32.xlu0 %v746
        %v778 = vpop.xlane.xlu0 %777
        %779 = vadd.xlane.f32.xlu0 %v748
        %v780 = vpop.xlane.xlu0 %779
        %781 = vadd.xlane.f32.xlu0 %v750
        %v782 = vpop.xlane.xlu0 %781
        %783 = vadd.xlane.f32.xlu0 %v752
        %v784 = vpop.xlane.xlu0 %783
        %785 = vadd.xlane.f32.xlu0 %v754
        %v786 = vpop.xlane.xlu0 %785
        %787 = vadd.xlane.f32.xlu0 %v756
        %v788 = vpop.xlane.xlu0 %787
        %789 = vadd.xlane.f32.xlu0 %v758
        %v790 = vpop.xlane.xlu0 %789
        %791 = vadd.xlane.f32.xlu0 %v760
        %v792 = vpop.xlane.xlu0 %791
        %793 = vadd.xlane.f32.xlu0 %v762
        %v794 = vpop.xlane.xlu0 %793
        %795 = vadd.xlane.f32.xlu0 %v764
        %v796 = vpop.xlane.xlu0 %795
        %797 = vadd.xlane.f32.xlu0 %v766
        %v798 = vpop.xlane.xlu0 %797
        %799 = vadd.xlane.f32.xlu0 %v768
        %v800 = vpop.xlane.xlu0 %799
        %801 = vadd.xlane.f32.xlu0 %v770
        %v802 = vpop.xlane.xlu0 %801
        %803 = vadd.xlane.f32.xlu0 %v772
        %v804 = vpop.xlane.xlu0 %803
        %805 = vadd.xlane.f32.xlu0 %v774
        %v806 = vpop.xlane.xlu0 %805
        %807 = vadd.xlane.f32.xlu0 %v776
        %v808 = vpop.xlane.xlu0 %807
        %v809 = vrcp.pop %v778
        %v810 = vrcp.pop %v780
        %v811 = vrcp.pop %v782
        %v812 = vrcp.pop %v784
        %v813 = vrcp.pop %v786
        %v814 = vrcp.pop %v788
        %v815 = vrcp.pop %v790
        %v816 = vrcp.pop %v792
        %v817 = vrcp.pop %v794
        %v818 = vrcp.pop %v796
        %v819 = vrcp.pop %v798
        %v820 = vrcp.pop %v800
        %v821 = vrcp.pop %v802
        %v822 = vrcp.pop %v804
        %v823 = vrcp.pop %v806
        %v824 = vrcp.pop %v808
        %v825 = vmul.f32 %v746, %v809
        %v826 = vmul.f32 %v748, %v810
        %v827 = vmul.f32 %v750, %v811
        %v828 = vmul.f32 %v752, %v812
        %v829 = vmul.f32 %v754, %v813
        %v830 = vmul.f32 %v756, %v814
        %v831 = vmul.f32 %v758, %v815
        %v832 = vmul.f32 %v760, %v816
        %v833 = vmul.f32 %v762, %v817
        %v834 = vmul.f32 %v764, %v818
        %v835 = vmul.f32 %v766, %v819
        %v836 = vmul.f32 %v768, %v820
        %v837 = vmul.f32 %v770, %v821
        %v838 = vmul.f32 %v772, %v822
        %v839 = vmul.f32 %v774, %v823
        %v840 = vmul.f32 %v776, %v824
        %v841 = vpack.c.bf16 %v826, %v825
        %v842 = vpack.c.bf16 %v828, %v827
        %v843 = vpack.c.bf16 %v830, %v829
        %v844 = vpack.c.bf16 %v832, %v831
        %v845 = vpack.c.bf16 %v834, %v833
        %v846 = vpack.c.bf16 %v836, %v835
        %v847 = vpack.c.bf16 %v838, %v837
        %v848 = vpack.c.bf16 %v840, %v839
        %849 = vmatprep.subr.bf16.mxu0 0
        %850 = vmatpush1.bf16.msra.mxu0 %v841
        %851 = vmatprep.subr.bf16.mxu0 0
        %852 = vmatpush1.bf16.msra.mxu0 %v842
        %853 = vmatprep.subr.bf16.mxu0 0
        %854 = vmatpush1.bf16.msra.mxu0 %v843
        %855 = vmatprep.subr.bf16.mxu0 0
        %856 = vmatpush1.bf16.msra.mxu0 %v844
        %857 = vmatprep.subr.bf16.mxu0 0
        %858 = vmatpush1.bf16.msra.mxu0 %v845
        %859 = vmatprep.subr.bf16.mxu0 0
        %860 = vmatpush1.bf16.msra.mxu0 %v846
        %861 = vmatprep.subr.bf16.mxu0 0
        %862 = vmatpush1.bf16.msra.mxu0 %v847
        %863 = vmatprep.subr.bf16.mxu0 0
        %864 = vmatpush1.bf16.msra.mxu0 %v848
        %865 = vmatprep.subr.bf16.mxu0 0
        %866 = vmatpush1.bf16.msra.mxu0 0
        %867 = vmatprep.subr.bf16.mxu0 0
        %868 = vmatpush1.bf16.msra.mxu0 0
        %869 = vmatprep.subr.bf16.mxu0 0
        %870 = vmatpush1.bf16.msra.mxu0 0
        %871 = vmatprep.subr.bf16.mxu0 0
        %872 = vmatpush1.bf16.msra.mxu0 0
        %873 = vmatprep.subr.bf16.mxu0 0
        %874 = vmatpush1.bf16.msra.mxu0 0
        %875 = vmatprep.subr.bf16.mxu0 0
        %876 = vmatpush1.bf16.msra.mxu0 0
        %877 = vmatprep.subr.bf16.mxu0 0
        %878 = vmatpush1.bf16.msra.mxu0 0
        %879 = vmatprep.subr.bf16.mxu0 0
        %880 = vmatpush1.bf16.msra.mxu0 0
        %881 = vmatprep.mubr.bf16.mxu0 0
        %882 = vmatmul.mubr.bf16.gmra.mrb[0].mxu0 %v555
        %v883 = vpop.f32.mrb[0].mxu0
        %v884 = vadd.f32 0.0, %v883
        %v885 = vpop.f32.mrb[0].mxu0
        %v886 = vpop.f32.mrb[0].mxu0
        %v887 = vpop.f32.mrb[0].mxu0
        %888 = vdwg.mxu0
        // Predicated region
        $region49: #{tpu_custom_call.1} parent=39 // pred_check
          %p889 = pneg %p254
        $region50: #{tpu_custom_call.1} parent=39 // pred_check_branch
          %891 = sbr.rel (%p889) target = $region52
        $region51: #{tpu_custom_call.1} parent=39 // pred_region
          %892 = vst [vmem:[#allocation3] sm:$0xf] %v884
        $region52: #{tpu_custom_call.1} parent=39 // pred_fallthru
          _
        %p893 = scmp.gt.s32.totalorder %s27, 0
        // Predicated region
        $region53: #{tpu_custom_call.1} parent=39 // pred_check
          %p894 = pneg %p893
        $region54: #{tpu_custom_call.1} parent=39 // pred_check_branch
          %896 = sbr.rel (%p894) target = $region56
        $region55: #{tpu_custom_call.1} parent=39 // pred_region
          %v897 = vld [vmem:[#allocation3] sm:$0xf]
          %v898 = vadd.f32 %v897, %v884
          %899 = vst [vmem:[#allocation3] sm:$0xf] %v898
        $region56: #{tpu_custom_call.1} parent=39 // pred_fallthru
          _
        // Predicated region
        $region57: #{tpu_custom_call.1} parent=39 // pred_check
          %p900 = pneg %p254
        $region58: #{tpu_custom_call.1} parent=39 // pred_check_branch
          %902 = sbr.rel (%p900) target = $region60
        $region59: #{tpu_custom_call.1} parent=39 // pred_region
          %v903 = vld [vmem:[%s4] sm:$0x3]
          %v904 = vld [vmem:[#allocation3] sm:$0x3]
          %v905 = vpack.c.bf16 %v904, %v904
          %v906 = vld [vmem:[#allocation3 + $0x2] sm:$0x3]
          %v907 = vpack.c.bf16 %v906, %v906
          %v908 = vld [vmem:[%s226] sm:$0x3]
          %v909 = vunpack.c.l.bf16 %v908
          %vm910 = vcmask 15360
          %v912 = vsel %vm910, %v903, 0
          %vm914 = vcmask 1040384
          %v916 = vsel %vm914, %v905, 0
          %918 = vmatprep.subr.bf16.mxu0 0
          %919 = vmatpush1.bf16.msra.mxu0 %v916
          %920 = vmatprep.subr.bf16.mxu0 0
          %921 = vmatpush1.bf16.msra.mxu0 0
          %922 = vmatprep.subr.bf16.mxu0 0
          %923 = vmatpush1.bf16.msra.mxu0 0
          %924 = vmatprep.subr.bf16.mxu0 0
          %925 = vmatpush1.bf16.msra.mxu0 0
          %926 = vmatprep.subr.bf16.mxu0 0
          %927 = vmatpush1.bf16.msra.mxu0 0
          %928 = vmatprep.subr.bf16.mxu0 0
          %929 = vmatpush1.bf16.msra.mxu0 0
          %930 = vmatprep.subr.bf16.mxu0 0
          %931 = vmatpush1.bf16.msra.mxu0 0
          %932 = vmatprep.subr.bf16.mxu0 0
          %933 = vmatpush1.bf16.msra.mxu0 0
          %934 = vmatprep.subr.bf16.mxu0 0
          %935 = vmatpush1.bf16.msra.mxu0 0
          %936 = vmatprep.subr.bf16.mxu0 0
          %937 = vmatpush1.bf16.msra.mxu0 0
          %938 = vmatprep.subr.bf16.mxu0 0
          %939 = vmatpush1.bf16.msra.mxu0 0
          %940 = vmatprep.subr.bf16.mxu0 0
          %941 = vmatpush1.bf16.msra.mxu0 0
          %942 = vmatprep.subr.bf16.mxu0 0
          %943 = vmatpush1.bf16.msra.mxu0 0
          %944 = vmatprep.subr.bf16.mxu0 0
          %945 = vmatpush1.bf16.msra.mxu0 0
          %946 = vmatprep.subr.bf16.mxu0 0
          %947 = vmatpush1.bf16.msra.mxu0 0
          %948 = vmatprep.subr.bf16.mxu0 0
          %949 = vmatpush1.bf16.msra.mxu0 0
          %950 = vmatprep.mubr.bf16.mxu0 0
          %951 = vmatmul.mubr.bf16.gmra.mrb[0].mxu0 %v912
          %v952 = vpop.f32.mrb[0].mxu0
          %v953 = vadd.f32 %v909, %v952
          %v954 = vpop.f32.mrb[0].mxu0
          %v955 = vpop.f32.mrb[0].mxu0
          %v956 = vpop.f32.mrb[0].mxu0
          %957 = vdwg.mxu0
          %958 = vst [vmem:[%s252] sm:$0xf] %v953
          %v959 = vld [vmem:[%s226 + $0x2] sm:$0x3]
          %v960 = vunpack.c.l.bf16 %v959
          %v962 = vsel %vm914, %v907, 0
          %964 = vmatprep.subr.bf16.mxu0 0
          %965 = vmatpush1.bf16.msra.mxu0 %v962
          %966 = vmatprep.subr.bf16.mxu0 0
          %967 = vmatpush1.bf16.msra.mxu0 0
          %968 = vmatprep.subr.bf16.mxu0 0
          %969 = vmatpush1.bf16.msra.mxu0 0
          %970 = vmatprep.subr.bf16.mxu0 0
          %971 = vmatpush1.bf16.msra.mxu0 0
          %972 = vmatprep.subr.bf16.mxu0 0
          %973 = vmatpush1.bf16.msra.mxu0 0
          %974 = vmatprep.subr.bf16.mxu0 0
          %975 = vmatpush1.bf16.msra.mxu0 0
          %976 = vmatprep.subr.bf16.mxu0 0
          %977 = vmatpush1.bf16.msra.mxu0 0
          %978 = vmatprep.subr.bf16.mxu0 0
          %979 = vmatpush1.bf16.msra.mxu0 0
          %980 = vmatprep.subr.bf16.mxu0 0
          %981 = vmatpush1.bf16.msra.mxu0 0
          %982 = vmatprep.subr.bf16.mxu0 0
          %983 = vmatpush1.bf16.msra.mxu0 0
          %984 = vmatprep.subr.bf16.mxu0 0
          %985 = vmatpush1.bf16.msra.mxu0 0
          %986 = vmatprep.subr.bf16.mxu0 0
          %987 = vmatpush1.bf16.msra.mxu0 0
          %988 = vmatprep.subr.bf16.mxu0 0
          %989 = vmatpush1.bf16.msra.mxu0 0
          %990 = vmatprep.subr.bf16.mxu0 0
          %991 = vmatpush1.bf16.msra.mxu0 0
          %992 = vmatprep.subr.bf16.mxu0 0
          %993 = vmatpush1.bf16.msra.mxu0 0
          %994 = vmatprep.subr.bf16.mxu0 0
          %995 = vmatpush1.bf16.msra.mxu0 0
          %996 = vmatprep.mubr.bf16.mxu0 0
          %997 = vmatmul.mubr.bf16.gmra.mrb[0].mxu0 %v912
          %v998 = vpop.f32.mrb[0].mxu0
          %v999 = vadd.f32 %v960, %v998
          %v1000 = vpop.f32.mrb[0].mxu0
          %v1001 = vpop.f32.mrb[0].mxu0
          %v1002 = vpop.f32.mrb[0].mxu0
          %1003 = vdwg.mxu0
          %1004 = vst [vmem:[%s252 + $0x4] sm:$0xf] %v999
        $region60: #{tpu_custom_call.1} parent=39 // pred_fallthru
          _
        %s1005 = sand.u32 %s152, 1
        %s1006 = scalar_lea.sflag [#allocation6], %s1005
        %s1007 = sand.u32 %s152, 1
        %s1008 = smul.addr %s1007, 8
        %s1009 = scalar_lea.vmem [#allocation7], %s1008
        // Predicated region
        $region61: #{tpu_custom_call.1} parent=39 // pred_check
          %p1010 = pneg %p162
        $region62: #{tpu_custom_call.1} parent=39 // pred_check_branch
          %1012 = sbr.rel (%p1010) target = $region64
        $region63: #{tpu_custom_call.1} parent=39 // pred_region
          %s1014 = ssub.s32 128, 128
          %1015 = vsyncadd %s1006, %s1014
          %s1016 = smul.addr %s26, 2
          %s1017 = smul.addr %s1016, 64
          %s1018 = scalar_lea.hbm %s5, %s1017
          %s1020 = sshll.u32 %s1009, 4
          %s1021 = int_to_ptr.vmem [resolvable:$true] %s1020
          %1023 = dma.vmem_to_hbm [thread:$0]  %s1021, 128, %s1018, %s1006
        $region64: #{tpu_custom_call.1} parent=39 // pred_fallthru
          _
      $region40: #{tpu_custom_call.1} parent=5 // pred_fallthru
        _
      %p1024 = scmp.le.s32.totalorder 2, %s17
      // Predicated region
      $region65: #{tpu_custom_call.1} parent=5 // pred_check
        %p1025 = pneg %p1024
      $region66: #{tpu_custom_call.1} parent=5 // pred_check_branch
        %1027 = sbr.rel (%p1025) target = $region68
      $region67: #{tpu_custom_call.1} parent=5 // pred_region
        %s1028 = ssub.s32 %s17, 2
        // Predicated region
        $region69: #{tpu_custom_call.1} parent=67 // pred_check
          %p1029 = pneg %p168
        $region70: #{tpu_custom_call.1} parent=67 // pred_check_branch
          %1031 = sbr.rel (%p1029) target = $region72
        $region71: #{tpu_custom_call.1} parent=67 // pred_region
          %s1032 = sand.u32 %s153, 1
          %s1033 = scalar_lea.sflag [#allocation6], %s1032
          %s1034 = sand.u32 %s153, 1
          %s1035 = smul.addr %s1034, 8
          %s1036 = scalar_lea.vmem [#allocation7], %s1035
          %1037 = dma.done %s1033, 128
        $region72: #{tpu_custom_call.1} parent=67 // pred_fallthru
          _
      $region68: #{tpu_custom_call.1} parent=5 // pred_fallthru
        _
    $region6: #{tpu_custom_call.1} parent=1 // loop_footer
      %s21 = sadd.s32 1, %s17
    $region7: #{tpu_custom_call.1} parent=1 // loop_footer_branch
      %16 = sbr.rel target = $region3
    $region8: #{tpu_custom_call.1} parent=1 // loop_exit
      _
    %1038 = vsyncpa [#allocation5], 1
    %s1039 = scalar_lea.sflag [#allocation5], 1
    %1040 = vsyncpa %s1039, 1
    %1041 = vsyncpa [#allocation6], 1
    %s1042 = scalar_lea.sflag [#allocation6], 1
    %1043 = vsyncpa %s1042, 1

</llo_original>
